<compile_context>
chip_gen: v7x
topology: tpu7x:2x2x1
jax: 0.10.0
libtpu: 0.0.40
codegen_flags: <defaults>
</compile_context>

<pallas_src>
import numpy as np
import jax
import jax.numpy as jnp
from jax.experimental import pallas as pl
from jax.experimental.pallas import tpu as pltpu


def _attpool_kernel(q_ref, k_ref, w_ref, bias_ref, out_ref, attn_ref):
    # q_ref:    (TB, d_q)
    # k_ref:    (TB, l, d_k)
    # w_ref:    (d_q, d_k)   W_qs^T, pre-scaled by 1/temperature
    # bias_ref: (1, d_k)     b_qs,  pre-scaled by 1/temperature
    # out_ref:  (TB, d_k)
    # attn_ref: (TB, l)
    #
    # NOTE: when b is not a multiple of the batch tile, the padded rows of the
    # last tile compute softmax over garbage; the masked writeback discards
    # them, so this is benign (do not add NaN checks here).
    q = q_ref[...]
    k = k_ref[...]
    w = w_ref[...]
    bias = bias_ref[...]

    # Linear projection on the MXU; the 1/sqrt(d_k) scale is already folded
    # into w and bias in the wrapper.
    qs = jnp.dot(q, w, preferred_element_type=jnp.float32) + bias     # (TB, d_k)

    tb, d_k = qs.shape

    # Attention logits as an MXU contraction (no (TB, l, d_k) f32 temporary):
    #   logits[b, l] = sum_d qs[b, d] * k[b, l, d]
    qs3 = qs.reshape(tb, 1, d_k).astype(k.dtype)                      # (TB, 1, d_k)
    logits = jnp.einsum('bqd,bkd->bqk', qs3, k,
                        preferred_element_type=jnp.float32)           # (TB, 1, l)

    # TODO(synk): mask support (masked_fill with -inf before softmax) omitted;
    # forward is exercised with mask=None.

    # Softmax over the sequence axis.  Exact divide: `attn` is part of the
    # module's returned contract, so no approx reciprocal here.
    m = jnp.max(logits, axis=-1, keepdims=True)
    e = jnp.exp(logits - m)
    s = jnp.sum(e, axis=-1, keepdims=True)
    attn = e / s                                                      # (TB, 1, l)

    # Dropout is identity in eval mode.

    # Weighted sum of values (v == k), again as an MXU contraction:
    #   out[b, d] = sum_l attn[b, l] * k[b, l, d]
    out = jnp.einsum('bqk,bkd->bqd', attn.astype(k.dtype), k,
                     preferred_element_type=jnp.float32)              # (TB, 1, d_k)

    out_ref[...] = out.reshape(out_ref.shape).astype(out_ref.dtype)
    attn_ref[...] = attn.reshape(attn_ref.shape).astype(attn_ref.dtype)


def _vmem_params():
    """Generation-aware (slab_budget_bytes, vmem_limit_bytes)."""
    try:
        vmem = pltpu.get_tpu_info().vmem_capacity_bytes
    except Exception:
        vmem = 128 << 20                       # assume a 128-MiB part if unknown
    if vmem <= (64 << 20):                     # v7x-class: 64 MiB per TensorCore
        return 10 << 20, 44 << 20
    return 20 << 20, 88 << 20                  # v5e / v6e: 128 MiB physical


def _pick_batch_tile(b, l, d_k, itemsize, slab_budget, target_steps=2):
    """Batch tile: big enough to amortize per-step overhead (~0.35 us/step),
    small enough that each double-buffered k slab fits the VMEM budget, and
    capped so the grid has >= target_steps iterations (megacore split on v7x
    plus something for the pipeline to overlap)."""
    if b <= 8:
        return b                               # full-dim block is always legal
    row_bytes = max(l * d_k * itemsize, 1)
    rows = max(slab_budget // row_bytes, 1)
    rows = min(rows, 512)                      # bound batched-matmul unrolling
    rows = min(rows, -(-b // target_steps))    # guarantee >= target_steps steps
    if rows >= b:
        return b
    tb = max((rows // 8) * 8, 8)               # sublane-aligned tile
    return min(tb, b)


def att_pool_layer(q, k, w_qs, b_qs):
    """q: (b, d_q), k: (b, l, d_k), w_qs: (d_k, d_q), b_qs: (d_k,)"""
    b, d_q = q.shape
    _, l, d_k = k.shape

    # Fold 1/temperature (= 1/sqrt(d_k)) into the projection weights + bias:
    # softmax((q W^T + b) . k / sqrt(d_k)) == softmax((q (W^T/s) + b/s) . k)
    inv_temp = 1.0 / float(np.sqrt(d_k))
    w_t = jnp.transpose(w_qs) * jnp.asarray(inv_temp, w_qs.dtype)     # (d_q, d_k)
    bias = (b_qs * jnp.asarray(inv_temp, b_qs.dtype)).reshape(1, d_k)

    slab_budget, vmem_limit = _vmem_params()
    tb = _pick_batch_tile(b, l, d_k, jnp.dtype(k.dtype).itemsize, slab_budget)
    grid = (pl.cdiv(b, tb),)

    # TODO(synk): for very long sequences (l*d_k per row too big for a VMEM
    # slab), add an inner "arbitrary" grid axis over l with an online-softmax
    # accumulator; not needed for the shapes exercised here.
    # NOTE: HBM roofline is only reachable when l and d_k are multiples of 128
    # (lane-dense stores); small l/d_k (as in the test) hit masked vst.msk.
    out, attn = pl.pallas_call(
        _attpool_kernel,
        out_shape=(
            jax.ShapeDtypeStruct((b, d_k), q.dtype),
            jax.ShapeDtypeStruct((b, l), q.dtype),   # attn is part of the module's contract
        ),
        grid=grid,
        in_specs=[
            pl.BlockSpec((tb, d_q), lambda i: (i, 0)),        # batch-tiled
            pl.BlockSpec((tb, l, d_k), lambda i: (i, 0, 0)),  # batch-tiled k slab (streamed)
            pl.BlockSpec((d_q, d_k), lambda i: (0, 0)),       # weights resident across grid
            pl.BlockSpec((1, d_k), lambda i: (0, 0)),         # bias resident across grid
        ],
        out_specs=(
            pl.BlockSpec((tb, d_k), lambda i: (i, 0)),
            pl.BlockSpec((tb, l), lambda i: (i, 0)),
        ),
        compiler_params=pltpu.CompilerParams(
            dimension_semantics=("parallel",),        # megacore-shardable on v7x
            vmem_limit_bytes=vmem_limit,
        ),
    )(q, k, w_t, bias)
    return out, attn


def _reference(q, k, w_qs, b_qs):
    d_k = k.shape[-1]
    qs = q @ w_qs.T + b_qs
    logits = jnp.sum(qs[:, None, :] * k, axis=2) / jnp.sqrt(jnp.float32(d_k))
    attn = jax.nn.softmax(logits, axis=1)
    out = jnp.sum(attn[:, :, None] * k, axis=1)
    return out, attn


if __name__ == "__main__":
    # Small shapes consistent with the module's forward contract.
    B, L, D_Q, D_K = 2, 8, 32, 32

    key = jax.random.PRNGKey(0)
    kq, kk, kw, kb = jax.random.split(key, 4)

    q = jax.random.normal(kq, (B, D_Q), dtype=jnp.float32)
    k = jax.random.normal(kk, (B, L, D_K), dtype=jnp.float32)

    # Deterministic parameter init matching __init__:
    #   W_qs ~ N(0, sqrt(2/(d_q+d_k))), bias small deterministic values.
    w_qs = jax.random.normal(kw, (D_K, D_Q), dtype=jnp.float32) * np.sqrt(
        2.0 / (D_Q + D_K)
    )
    b_qs = jax.random.normal(kb, (D_K,), dtype=jnp.float32) * 0.01

    out, attn = att_pool_layer(q, k, w_qs, b_qs)
    out = jax.block_until_ready(out)
    attn = jax.block_until_ready(attn)

    ref_out, ref_attn = _reference(q, k, w_qs, b_qs)
    np.testing.assert_allclose(np.asarray(out), np.asarray(ref_out), atol=1e-4, rtol=1e-3)
    np.testing.assert_allclose(np.asarray(attn), np.asarray(ref_attn), atol=1e-4, rtol=1e-3)

    print("KERNEL_OK")
</pallas_src>

<mosaic_0001>
module attributes {stable_mosaic.version = 11 : i64} {
  func.func @_attpool_kernel(%arg0: i32, %arg1: memref<2x32xf32, #tpu.memory_space<vmem>>, %arg2: memref<2x8x32xf32, #tpu.memory_space<vmem>>, %arg3: memref<32x32xf32, #tpu.memory_space<vmem>>, %arg4: memref<1x32xf32, #tpu.memory_space<vmem>>, %arg5: memref<2x32xf32, #tpu.memory_space<vmem>>, %arg6: memref<2x8xf32, #tpu.memory_space<vmem>>) attributes {dimension_semantics = [#tpu.dimension_semantics<parallel>], iteration_bounds = array<i64: 1>, scalar_prefetch = 0 : i64, scratch_operands = 0 : i64, tpu.core_type = #tpu.core_type<tc>, window_params = [{transform_indices = @transform_0, window_bounds = array<i64: 2, 32>}, {transform_indices = @transform_1, window_bounds = array<i64: 2, 8, 32>}, {pipeline_mode = #tpu.pipeline_mode<synchronous>, transform_indices = @transform_2, window_bounds = array<i64: 32, 32>}, {pipeline_mode = #tpu.pipeline_mode<synchronous>, transform_indices = @transform_3, window_bounds = array<i64: 1, 32>}, {transform_indices = @transform_4, window_bounds = array<i64: 2, 32>}, {transform_indices = @transform_5, window_bounds = array<i64: 2, 8>}]} {
    %c0 = arith.constant 0 : index
    %c0_0 = arith.constant 0 : index
    %0 = vector.load %arg1[%c0, %c0_0] : memref<2x32xf32, #tpu.memory_space<vmem>>, vector<2x32xf32>
    %c0_1 = arith.constant 0 : index
    %c0_2 = arith.constant 0 : index
    %c0_3 = arith.constant 0 : index
    %1 = vector.load %arg2[%c0_1, %c0_2, %c0_3] : memref<2x8x32xf32, #tpu.memory_space<vmem>>, vector<2x8x32xf32>
    %c0_4 = arith.constant 0 : index
    %c0_5 = arith.constant 0 : index
    %2 = vector.load %arg3[%c0_4, %c0_5] : memref<32x32xf32, #tpu.memory_space<vmem>>, vector<32x32xf32>
    %c0_6 = arith.constant 0 : index
    %c0_7 = arith.constant 0 : index
    %3 = vector.load %arg4[%c0_6, %c0_7] : memref<1x32xf32, #tpu.memory_space<vmem>>, vector<1x32xf32>
    %cst = arith.constant dense<0.000000e+00> : vector<2x32xf32>
    %4 = tpu.matmul %0, %2, %cst {dimension_numbers = #tpu.dot_dimension_numbers<[1], [0], [0], [1], [0, 0, 1, 1], [], []>} : vector<2x32xf32>, vector<32x32xf32>, vector<2x32xf32> -> vector<2x32xf32>
    %5 = vector.broadcast %3 : vector<1x32xf32> to vector<2x32xf32>
    %6 = arith.addf %4, %5 : vector<2x32xf32>
    %7 = vector.shape_cast %6 : vector<2x32xf32> to vector<2x1x32xf32>
    "tpu.trace_start"() <{level = 10 : i32, message = "bqd,bkd->bqk"}> : () -> ()
    %cst_8 = arith.constant dense<0.000000e+00> : vector<2x1x8xf32>
    %8 = tpu.matmul %7, %1, %cst_8 {dimension_numbers = #tpu.dot_dimension_numbers<[2], [2], [1], [1], [0, 0, 0, 1, 1, 1], [0], [0]>} : vector<2x1x32xf32>, vector<2x8x32xf32>, vector<2x1x8xf32> -> vector<2x1x8xf32>
    "tpu.trace_stop"() : () -> ()
    %cst_9 = arith.constant dense<0xFF800000> : vector<2x1xf32>
    %9 = vector.multi_reduction <maximumf>, %8, %cst_9 [2] : vector<2x1x8xf32> to vector<2x1xf32>
    %10 = vector.shape_cast %9 : vector<2x1xf32> to vector<2x1x1xf32>
    %11 = vector.broadcast %10 : vector<2x1x1xf32> to vector<2x1x8xf32>
    %12 = arith.subf %8, %11 : vector<2x1x8xf32>
    %13 = math.exp %12 : vector<2x1x8xf32>
    %cst_10 = arith.constant dense<0.000000e+00> : vector<2x1xf32>
    %14 = vector.multi_reduction <add>, %13, %cst_10 [2] : vector<2x1x8xf32> to vector<2x1xf32>
    %15 = vector.shape_cast %14 : vector<2x1xf32> to vector<2x1x1xf32>
    %16 = vector.broadcast %15 : vector<2x1x1xf32> to vector<2x1x8xf32>
    %17 = arith.divf %13, %16 : vector<2x1x8xf32>
    "tpu.trace_start"() <{level = 10 : i32, message = "bqk,bkd->bqd"}> : () -> ()
    %cst_11 = arith.constant dense<0.000000e+00> : vector<2x1x32xf32>
    %18 = tpu.matmul %17, %1, %cst_11 {dimension_numbers = #tpu.dot_dimension_numbers<[2], [1], [1], [2], [0, 0, 0, 1, 1, 2], [0], [0]>} : vector<2x1x8xf32>, vector<2x8x32xf32>, vector<2x1x32xf32> -> vector<2x1x32xf32>
    "tpu.trace_stop"() : () -> ()
    %19 = vector.shape_cast %18 : vector<2x1x32xf32> to vector<2x32xf32>
    %c0_12 = arith.constant 0 : index
    %c0_13 = arith.constant 0 : index
    %20 = vector.load %arg5[%c0_12, %c0_13] : memref<2x32xf32, #tpu.memory_space<vmem>>, vector<2x32xf32>
    tpu.vector_store %arg5[%c0_12, %c0_13], %19 {strides = array<i32>} : memref<2x32xf32, #tpu.memory_space<vmem>>, vector<2x32xf32>,
    %21 = vector.shape_cast %17 : vector<2x1x8xf32> to vector<2x8xf32>
    %c0_14 = arith.constant 0 : index
    %c0_15 = arith.constant 0 : index
    %22 = vector.load %arg6[%c0_14, %c0_15] : memref<2x8xf32, #tpu.memory_space<vmem>>, vector<2x8xf32>
    tpu.vector_store %arg6[%c0_14, %c0_15], %21 {strides = array<i32>} : memref<2x8xf32, #tpu.memory_space<vmem>>, vector<2x8xf32>,
    return
  }
  func.func @transform_0(%arg0: i32) -> (i32, i32) {
    %c0_i32 = arith.constant 0 : i32
    %c0_i32_0 = arith.constant 0 : i32
    return %arg0, %c0_i32 : i32, i32
  }
  func.func @transform_1(%arg0: i32) -> (i32, i32, i32) {
    %c0_i32 = arith.constant 0 : i32
    %c0_i32_0 = arith.constant 0 : i32
    %c0_i32_1 = arith.constant 0 : i32
    return %arg0, %c0_i32, %c0_i32_0 : i32, i32, i32
  }
  func.func @transform_2(%arg0: i32) -> (i32, i32) {
    %c0_i32 = arith.constant 0 : i32
    %c0_i32_0 = arith.constant 0 : i32
    %c0_i32_1 = arith.constant 0 : i32
    return %c0_i32, %c0_i32_0 : i32, i32
  }
  func.func @transform_3(%arg0: i32) -> (i32, i32) {
    %c0_i32 = arith.constant 0 : i32
    %c0_i32_0 = arith.constant 0 : i32
    %c0_i32_1 = arith.constant 0 : i32
    return %c0_i32, %c0_i32_0 : i32, i32
  }
  func.func @transform_4(%arg0: i32) -> (i32, i32) {
    %c0_i32 = arith.constant 0 : i32
    %c0_i32_0 = arith.constant 0 : i32
    return %arg0, %c0_i32 : i32, i32
  }
  func.func @transform_5(%arg0: i32) -> (i32, i32) {
    %c0_i32 = arith.constant 0 : i32
    %c0_i32_0 = arith.constant 0 : i32
    return %arg0, %c0_i32 : i32, i32
  }
}

</mosaic_0001>

<llo_original>
// kernel: tpu_custom_call.1
$region0: #{tpu_custom_call.1}
  #allocation0 [shape = 'u32[]', space=smem, size = 0x4, offset = 0x4, fixed_abs, tag = 'smem constant byte address 0x4 - core index']
  #allocation1 [shape = 'u32[144,128]{1,0:T(1,128)}', space=vmem, size = 0x12000, scoped, tag = 'internal scratch']
  %s0 = inlined_call_operand.hbm [shape: f32[2,32], index: 0, kind: input, shape index: {}]
  %s1 = inlined_call_operand.hbm [shape: f32[2,8,32], index: 1, kind: input, shape index: {}]
  %s2 = inlined_call_operand.hbm [shape: f32[32,32], index: 2, kind: input, shape index: {}]
  %s3 = inlined_call_operand.hbm [shape: f32[1,32], index: 3, kind: input, shape index: {}]
  %s4 = inlined_call_operand.hbm [shape: f32[2,32], index: 4, kind: output, shape index: {0}]
  %s5 = inlined_call_operand.hbm [shape: f32[2,8], index: 5, kind: output, shape index: {1}]
  %6 = xla_tuple %s4, %s5
  %s7 = sld [smem:[#allocation0]]
  $region50: #{tpu_custom_call.1} parent=0
    _
  %s9 = ssub.s32 1, %s7
  %s10 = scalar_select 0, %s9, %s7
  $region1: #{tpu_custom_call.1} parent=0
    #allocation2 [shape = 'u8[1024]{0}', space=vmem, size = 0x400, scoped, tag = 'input window, operand 0, single buffered']
    #allocation3 [shape = 's32[1]{0}', space=sflag, size = 0x4, scoped, tag = 'scoped memory for tpu_custom_call.1']
    #allocation4 [shape = 's32[1]{0}', space=sflag, size = 0x4, scoped, tag = 'scoped memory for tpu_custom_call.1']
    #allocation5 [shape = 'u8[8192]{0}', space=vmem, size = 0x2000, scoped, tag = 'input window, operand 1, single buffered']
    #allocation6 [shape = 's32[1]{0}', space=sflag, size = 0x4, scoped, tag = 'scoped memory for tpu_custom_call.1']
    #allocation7 [shape = 'u8[16384]{0}', space=vmem, size = 0x4000, scoped, tag = 'input window, operand 2, single buffered']
    #allocation8 [shape = 'u8[512]{0}', space=vmem, size = 0x400, scoped, tag = 'input window, operand 3, single buffered']
    #allocation9 [shape = 's32[1]{0}', space=sflag, size = 0x4, scoped, tag = 'scoped memory for tpu_custom_call.1']
    #allocation10 [shape = 'u8[1024]{0}', space=vmem, size = 0x400, scoped, tag = 'output window, operand 0, single buffered']
    #allocation11 [shape = 'u8[1024]{0}', space=vmem, size = 0x400, scoped, tag = 'output window, operand 1, single buffered']
    #allocation12 [shape = 's32[1]{0}', space=sflag, size = 0x4, scoped, tag = 'scoped memory for tpu_custom_call.1']
    %11 = vsyncpa [#allocation3], 0
    %12 = vsyncpa [#allocation6], 0
    %13 = vsyncpa [#allocation9], 0
    %14 = vsyncpa [#allocation4], 0
    %15 = vsyncpa [#allocation12], 0
    // Predicated region
    $region2: #{tpu_custom_call.1} parent=1 // pred_check
      _
    $region3: #{tpu_custom_call.1} parent=1 // pred_check_branch
      %17 = sbr.rel (0) target = $region5
    $region4: #{tpu_custom_call.1} parent=1 // pred_region
      %s19 = ssub.s32 32, 32
      %20 = vsyncadd [#allocation3], %s19
      %s22 = sshll.u32 [#allocation2], 4
      %s23 = int_to_ptr.vmem [resolvable:$true] %s22
      %25 = dma.hbm_to_vmem [thread:$0]  %s0, 32, %s23, [#allocation3]
    $region5: #{tpu_custom_call.1} parent=1 // pred_fallthru
      _
    // Predicated region
    $region6: #{tpu_custom_call.1} parent=1 // pred_check
      _
    $region7: #{tpu_custom_call.1} parent=1 // pred_check_branch
      %27 = sbr.rel (0) target = $region9
    $region8: #{tpu_custom_call.1} parent=1 // pred_region
      %s29 = ssub.s32 256, 256
      %30 = vsyncadd [#allocation6], %s29
      %s31 = sshll.u32 [#allocation5], 4
      %s32 = int_to_ptr.vmem [resolvable:$true] %s31
      %37 = dma.hbm_to_vmem [thread:$0]  %s1, 256, %s32, [#allocation6], 128, 128, 8
    $region9: #{tpu_custom_call.1} parent=1 // pred_fallthru
      _
    // Predicated region
    $region10: #{tpu_custom_call.1} parent=1 // pred_check
      _
    $region11: #{tpu_custom_call.1} parent=1 // pred_check_branch
      %39 = sbr.rel (0) target = $region13
    $region12: #{tpu_custom_call.1} parent=1 // pred_region
      %s41 = ssub.s32 512, 512
      %42 = vsyncadd [#allocation6], %s41
      %s43 = sshll.u32 [#allocation7], 4
      %s44 = int_to_ptr.vmem [resolvable:$true] %s43
      %49 = dma.hbm_to_vmem [thread:$0]  %s2, 512, %s44, [#allocation6], 128, 128, 8
    $region13: #{tpu_custom_call.1} parent=1 // pred_fallthru
      _
    // Predicated region
    $region14: #{tpu_custom_call.1} parent=1 // pred_check
      _
    $region15: #{tpu_custom_call.1} parent=1 // pred_check_branch
      %51 = sbr.rel (0) target = $region17
    $region16: #{tpu_custom_call.1} parent=1 // pred_region
      %s53 = ssub.s32 16, 16
      %54 = vsyncadd [#allocation9], %s53
      %s56 = sshll.u32 [#allocation8], 4
      %s57 = int_to_ptr.vmem [resolvable:$true] %s56
      %59 = dma.hbm_to_vmem [thread:$0]  %s3, 16, %s57, [#allocation9]
    $region17: #{tpu_custom_call.1} parent=1 // pred_fallthru
      _
    // Predicated region
    $region18: #{tpu_custom_call.1} parent=1 // pred_check
      _
    $region19: #{tpu_custom_call.1} parent=1 // pred_check_branch
      %61 = sbr.rel (0) target = $region21
    $region20: #{tpu_custom_call.1} parent=1 // pred_region
      %62 = dma.done [#allocation3], 32
    $region21: #{tpu_custom_call.1} parent=1 // pred_fallthru
      _
    // Predicated region
    $region22: #{tpu_custom_call.1} parent=1 // pred_check
      _
    $region23: #{tpu_custom_call.1} parent=1 // pred_check_branch
      %64 = sbr.rel (0) target = $region25
    $region24: #{tpu_custom_call.1} parent=1 // pred_region
      %65 = dma.done [#allocation6], 256
    $region25: #{tpu_custom_call.1} parent=1 // pred_fallthru
      _
    // Predicated region
    $region26: #{tpu_custom_call.1} parent=1 // pred_check
      _
    $region27: #{tpu_custom_call.1} parent=1 // pred_check_branch
      %67 = sbr.rel (0) target = $region29
    $region28: #{tpu_custom_call.1} parent=1 // pred_region
      %68 = dma.done [#allocation6], 512
    $region29: #{tpu_custom_call.1} parent=1 // pred_fallthru
      _
    // Predicated region
    $region30: #{tpu_custom_call.1} parent=1 // pred_check
      _
    $region31: #{tpu_custom_call.1} parent=1 // pred_check_branch
      %70 = sbr.rel (0) target = $region33
    $region32: #{tpu_custom_call.1} parent=1 // pred_region
      %71 = dma.done [#allocation9], 16
    $region33: #{tpu_custom_call.1} parent=1 // pred_fallthru
      _
    %v72 = vld [vmem:[#allocation2] sm:$0x3]
    %v73 = vld [vmem:[#allocation5] sm:$0xff]
    %v74 = vld [vmem:[#allocation5 + $0x8] sm:$0xff]
    %v75 = vld [vmem:[#allocation7] sm:$0xff]
    %v76 = vld [vmem:[#allocation7 + $0x8] sm:$0xff]
    %v77 = vld [vmem:[#allocation7 + $0x10] sm:$0xff]
    %v78 = vld [vmem:[#allocation7 + $0x18] sm:$0xff]
    %v79 = vld [vmem:[#allocation8] sm:$0x1]
    %v81 = vlaneseq
    %v82 = vshrl.u32 %v81, 7
    %v83 = vsub.s32 0, %v82
    %v84 = vrot.slane %v79, %v83
    %vm86 = vcmask 261120
    %v88 = vsel %vm86, %v72, 0
    %90 = vmatprep.subr.mxu0 0.0
    %91 = vmatpush1.msra.mxu0 %v75
    %92 = vmatprep.subr.mxu0 0.0
    %93 = vmatpush1.msra.mxu0 %v76
    %94 = vmatprep.subr.mxu0 0.0
    %95 = vmatpush1.msra.mxu0 %v77
    %96 = vmatprep.subr.mxu0 0.0
    %97 = vmatpush1.msra.mxu0 %v78
    %98 = vmatprep.subr.mxu0 0.0
    %99 = vmatpush1.msra.mxu0 0.0
    %100 = vmatprep.subr.mxu0 0.0
    %101 = vmatpush1.msra.mxu0 0.0
    %102 = vmatprep.subr.mxu0 0.0
    %103 = vmatpush1.msra.mxu0 0.0
    %104 = vmatprep.subr.mxu0 0.0
    %105 = vmatpush1.msra.mxu0 0.0
    %106 = vmatprep.subr.mxu0 0.0
    %107 = vmatpush1.msra.mxu0 0.0
    %108 = vmatprep.subr.mxu0 0.0
    %109 = vmatpush1.msra.mxu0 0.0
    %110 = vmatprep.subr.mxu0 0.0
    %111 = vmatpush1.msra.mxu0 0.0
    %112 = vmatprep.subr.mxu0 0.0
    %113 = vmatpush1.msra.mxu0 0.0
    %114 = vmatprep.subr.mxu0 0.0
    %115 = vmatpush1.msra.mxu0 0.0
    %116 = vmatprep.subr.mxu0 0.0
    %117 = vmatpush1.msra.mxu0 0.0
    %118 = vmatprep.subr.mxu0 0.0
    %119 = vmatpush1.msra.mxu0 0.0
    %120 = vmatprep.subr.mxu0 0.0
    %121 = vmatpush1.msra.mxu0 0.0
    %122 = vmatprep.subr.mxu0 0.0
    %123 = vmatpush1.msra.mxu0 0.0
    %124 = vmatprep.subr.mxu0 0.0
    %125 = vmatpush1.msra.mxu0 0.0
    %126 = vmatprep.subr.mxu0 0.0
    %127 = vmatpush1.msra.mxu0 0.0
    %128 = vmatprep.subr.mxu0 0.0
    %129 = vmatpush1.msra.mxu0 0.0
    %130 = vmatprep.subr.mxu0 0.0
    %131 = vmatpush1.msra.mxu0 0.0
    %132 = vmatprep.subr.mxu0 0.0
    %133 = vmatpush1.msra.mxu0 0.0
    %134 = vmatprep.subr.mxu0 0.0
    %135 = vmatpush1.msra.mxu0 0.0
    %136 = vmatprep.subr.mxu0 0.0
    %137 = vmatpush1.msra.mxu0 0.0
    %138 = vmatprep.subr.mxu0 0.0
    %139 = vmatpush1.msra.mxu0 0.0
    %140 = vmatprep.subr.mxu0 0.0
    %141 = vmatpush1.msra.mxu0 0.0
    %142 = vmatprep.subr.mxu0 0.0
    %143 = vmatpush1.msra.mxu0 0.0
    %144 = vmatprep.subr.mxu0 0.0
    %145 = vmatpush1.msra.mxu0 0.0
    %146 = vmatprep.subr.mxu0 0.0
    %147 = vmatpush1.msra.mxu0 0.0
    %148 = vmatprep.subr.mxu0 0.0
    %149 = vmatpush1.msra.mxu0 0.0
    %150 = vmatprep.subr.mxu0 0.0
    %151 = vmatpush1.msra.mxu0 0.0
    %152 = vmatprep.subr.mxu0 0.0
    %153 = vmatpush1.msra.mxu0 0.0
    %154 = vmatprep.mubr.f32.mxu0 0.0
    %155 = vmatmul.mubr.f32.gmra.mrb[0].mxu0 %v88
    %v156 = vpop.f32.mrb[0].mxu0
    %v157 = vadd.f32 %v84, %v156
    %v158 = vpop.f32.mrb[0].mxu0
    %159 = vdwg.mxu0
    %v162 = vunpack.c.l.s4 1966171168
    %v163 = vunpack.c.0.s8 %v162
    %v164 = vlaneseq
    %v165 = vshrl.u32 %v164, 7
    %v166 = vsub.s32 %v163, %v165
    %v167 = vrot.slane %v157, %v166
    %v168 = vcombine.high %v167, %v167
    %v170 = vunpack.c.l.s4 1966171168
    %v171 = vunpack.c.0.s8 %v170
    %v172 = vlaneseq
    %v173 = vshrl.u32 %v172, 7
    %v174 = vsub.s32 %v171, %v173
    %v175 = vrot.slane %v167, %v174
    %v177 = vunpack.c.l.s4 1966171168
    %v178 = vunpack.c.0.s8 %v177
    %v179 = vlaneseq
    %v180 = vshrl.u32 %v179, 7
    %v181 = vsub.s32 %v178, %v180
    %v182 = vrot.slane %v168, %v181
    %v183 = vsel %vm86, %v175, 0
    %v186 = vsel %vm86, %v73, 0
    %188 = vmatprep.subr.mxu0 0.0
    %189 = vmatpush1.xpose.msra.mxu0 %v186
    %190 = vmatprep.subr.mxu0 0.0
    %191 = vmatpush1.xpose.msra.mxu0 0.0
    %192 = vmatprep.subr.mxu0 0.0
    %193 = vmatpush1.xpose.msra.mxu0 0.0
    %194 = vmatprep.subr.mxu0 0.0
    %195 = vmatpush1.xpose.msra.mxu0 0.0
    %196 = vmatprep.subr.mxu0 0.0
    %197 = vmatpush1.xpose.msra.mxu0 0.0
    %198 = vmatprep.subr.mxu0 0.0
    %199 = vmatpush1.xpose.msra.mxu0 0.0
    %200 = vmatprep.subr.mxu0 0.0
    %201 = vmatpush1.xpose.msra.mxu0 0.0
    %202 = vmatprep.subr.mxu0 0.0
    %203 = vmatpush1.xpose.msra.mxu0 0.0
    %204 = vmatprep.subr.mxu0 0.0
    %205 = vmatpush1.xpose.msra.mxu0 0.0
    %206 = vmatprep.subr.mxu0 0.0
    %207 = vmatpush1.xpose.msra.mxu0 0.0
    %208 = vmatprep.subr.mxu0 0.0
    %209 = vmatpush1.xpose.msra.mxu0 0.0
    %210 = vmatprep.subr.mxu0 0.0
    %211 = vmatpush1.xpose.msra.mxu0 0.0
    %212 = vmatprep.subr.mxu0 0.0
    %213 = vmatpush1.xpose.msra.mxu0 0.0
    %214 = vmatprep.subr.mxu0 0.0
    %215 = vmatpush1.xpose.msra.mxu0 0.0
    %216 = vmatprep.subr.mxu0 0.0
    %217 = vmatpush1.xpose.msra.mxu0 0.0
    %218 = vmatprep.subr.mxu0 0.0
    %219 = vmatpush1.xpose.msra.mxu0 0.0
    %220 = vmatprep.subr.mxu0 0.0
    %221 = vmatpush1.xpose.msra.mxu0 0.0
    %222 = vmatprep.subr.mxu0 0.0
    %223 = vmatpush1.xpose.msra.mxu0 0.0
    %224 = vmatprep.subr.mxu0 0.0
    %225 = vmatpush1.xpose.msra.mxu0 0.0
    %226 = vmatprep.subr.mxu0 0.0
    %227 = vmatpush1.xpose.msra.mxu0 0.0
    %228 = vmatprep.subr.mxu0 0.0
    %229 = vmatpush1.xpose.msra.mxu0 0.0
    %230 = vmatprep.subr.mxu0 0.0
    %231 = vmatpush1.xpose.msra.mxu0 0.0
    %232 = vmatprep.subr.mxu0 0.0
    %233 = vmatpush1.xpose.msra.mxu0 0.0
    %234 = vmatprep.subr.mxu0 0.0
    %235 = vmatpush1.xpose.msra.mxu0 0.0
    %236 = vmatprep.subr.mxu0 0.0
    %237 = vmatpush1.xpose.msra.mxu0 0.0
    %238 = vmatprep.subr.mxu0 0.0
    %239 = vmatpush1.xpose.msra.mxu0 0.0
    %240 = vmatprep.subr.mxu0 0.0
    %241 = vmatpush1.xpose.msra.mxu0 0.0
    %242 = vmatprep.subr.mxu0 0.0
    %243 = vmatpush1.xpose.msra.mxu0 0.0
    %244 = vmatprep.subr.mxu0 0.0
    %245 = vmatpush1.xpose.msra.mxu0 0.0
    %246 = vmatprep.subr.mxu0 0.0
    %247 = vmatpush1.xpose.msra.mxu0 0.0
    %248 = vmatprep.subr.mxu0 0.0
    %249 = vmatpush1.xpose.msra.mxu0 0.0
    %250 = vmatprep.subr.mxu0 0.0
    %251 = vmatpush1.xpose.msra.mxu0 0.0
    %252 = vmatprep.mubr.f32.mxu0 0.0
    %253 = vmatmul.mubr.f32.gmra.mrb[0].mxu0 %v183
    %v254 = vpop.f32.mrb[0].mxu0
    %v255 = vadd.f32 0.0, %v254
    %v256 = vpop.f32.mrb[0].mxu0
    %257 = vdwg.mxu0
    %v258 = vsel %vm86, %v182, 0
    %v261 = vsel %vm86, %v74, 0
    %263 = vmatprep.subr.mxu0 0.0
    %264 = vmatpush1.xpose.msra.mxu0 %v261
    %265 = vmatprep.subr.mxu0 0.0
    %266 = vmatpush1.xpose.msra.mxu0 0.0
    %267 = vmatprep.subr.mxu0 0.0
    %268 = vmatpush1.xpose.msra.mxu0 0.0
    %269 = vmatprep.subr.mxu0 0.0
    %270 = vmatpush1.xpose.msra.mxu0 0.0
    %271 = vmatprep.subr.mxu0 0.0
    %272 = vmatpush1.xpose.msra.mxu0 0.0
    %273 = vmatprep.subr.mxu0 0.0
    %274 = vmatpush1.xpose.msra.mxu0 0.0
    %275 = vmatprep.subr.mxu0 0.0
    %276 = vmatpush1.xpose.msra.mxu0 0.0
    %277 = vmatprep.subr.mxu0 0.0
    %278 = vmatpush1.xpose.msra.mxu0 0.0
    %279 = vmatprep.subr.mxu0 0.0
    %280 = vmatpush1.xpose.msra.mxu0 0.0
    %281 = vmatprep.subr.mxu0 0.0
    %282 = vmatpush1.xpose.msra.mxu0 0.0
    %283 = vmatprep.subr.mxu0 0.0
    %284 = vmatpush1.xpose.msra.mxu0 0.0
    %285 = vmatprep.subr.mxu0 0.0
    %286 = vmatpush1.xpose.msra.mxu0 0.0
    %287 = vmatprep.subr.mxu0 0.0
    %288 = vmatpush1.xpose.msra.mxu0 0.0
    %289 = vmatprep.subr.mxu0 0.0
    %290 = vmatpush1.xpose.msra.mxu0 0.0
    %291 = vmatprep.subr.mxu0 0.0
    %292 = vmatpush1.xpose.msra.mxu0 0.0
    %293 = vmatprep.subr.mxu0 0.0
    %294 = vmatpush1.xpose.msra.mxu0 0.0
    %295 = vmatprep.subr.mxu0 0.0
    %296 = vmatpush1.xpose.msra.mxu0 0.0
    %297 = vmatprep.subr.mxu0 0.0
    %298 = vmatpush1.xpose.msra.mxu0 0.0
    %299 = vmatprep.subr.mxu0 0.0
    %300 = vmatpush1.xpose.msra.mxu0 0.0
    %301 = vmatprep.subr.mxu0 0.0
    %302 = vmatpush1.xpose.msra.mxu0 0.0
    %303 = vmatprep.subr.mxu0 0.0
    %304 = vmatpush1.xpose.msra.mxu0 0.0
    %305 = vmatprep.subr.mxu0 0.0
    %306 = vmatpush1.xpose.msra.mxu0 0.0
    %307 = vmatprep.subr.mxu0 0.0
    %308 = vmatpush1.xpose.msra.mxu0 0.0
    %309 = vmatprep.subr.mxu0 0.0
    %310 = vmatpush1.xpose.msra.mxu0 0.0
    %311 = vmatprep.subr.mxu0 0.0
    %312 = vmatpush1.xpose.msra.mxu0 0.0
    %313 = vmatprep.subr.mxu0 0.0
    %314 = vmatpush1.xpose.msra.mxu0 0.0
    %315 = vmatprep.subr.mxu0 0.0
    %316 = vmatpush1.xpose.msra.mxu0 0.0
    %317 = vmatprep.subr.mxu0 0.0
    %318 = vmatpush1.xpose.msra.mxu0 0.0
    %319 = vmatprep.subr.mxu0 0.0
    %320 = vmatpush1.xpose.msra.mxu0 0.0
    %321 = vmatprep.subr.mxu0 0.0
    %322 = vmatpush1.xpose.msra.mxu0 0.0
    %323 = vmatprep.subr.mxu0 0.0
    %324 = vmatpush1.xpose.msra.mxu0 0.0
    %325 = vmatprep.subr.mxu0 0.0
    %326 = vmatpush1.xpose.msra.mxu0 0.0
    %327 = vmatprep.mubr.f32.mxu0 0.0
    %328 = vmatmul.mubr.f32.gmra.mrb[0].mxu0 %v258
    %v329 = vpop.f32.mrb[0].mxu0
    %v330 = vadd.f32 0.0, %v329
    %v331 = vpop.f32.mrb[0].mxu0
    %332 = vdwg.mxu0
    %vm333 = vcmask 57344
    %v334 = vsel %vm333, %v255, -inf
    %335 = vmax.xlane.f32.xlu0 %v334
    %v336 = vpop.xlane.xlu0 %335
    %v337 = vsel %vm333, %v330, -inf
    %338 = vmax.xlane.f32.xlu0 %v337
    %v339 = vpop.xlane.xlu0 %338
    %v340 = vsub.f32 %v255, %v336
    %v341 = vsub.f32 %v330, %v339
    %v342 = vmul.f32 %v340, 1.442695
    %v343 = vpow.pop %v342
    %v344 = vmul.f32 %v341, 1.442695
    %v345 = vpow.pop %v344
    %v346 = vsel %vm333, %v343, 0.0
    %347 = vadd.xlane.f32.xlu0 %v346
    %v348 = vpop.xlane.xlu0 %347
    %v349 = vsel %vm333, %v345, 0.0
    %350 = vadd.xlane.f32.xlu0 %v349
    %v351 = vpop.xlane.xlu0 %350
    %v352 = vrcp.pop %v348
    %v353 = vmul.f32 %v343, %v352
    %v354 = vrcp.pop %v351
    %v355 = vmul.f32 %v345, %v354
    %vm356 = vcmask 64512
    %v358 = vsel %vm356, %v353, 0
    %360 = vmatprep.subr.mxu0 0.0
    %361 = vmatpush1.msra.mxu0 %v73
    %362 = vmatprep.subr.mxu0 0.0
    %363 = vmatpush1.msra.mxu0 0.0
    %364 = vmatprep.subr.mxu0 0.0
    %365 = vmatpush1.msra.mxu0 0.0
    %366 = vmatprep.subr.mxu0 0.0
    %367 = vmatpush1.msra.mxu0 0.0
    %368 = vmatprep.subr.mxu0 0.0
    %369 = vmatpush1.msra.mxu0 0.0
    %370 = vmatprep.subr.mxu0 0.0
    %371 = vmatpush1.msra.mxu0 0.0
    %372 = vmatprep.subr.mxu0 0.0
    %373 = vmatpush1.msra.mxu0 0.0
    %374 = vmatprep.subr.mxu0 0.0
    %375 = vmatpush1.msra.mxu0 0.0
    %376 = vmatprep.subr.mxu0 0.0
    %377 = vmatpush1.msra.mxu0 0.0
    %378 = vmatprep.subr.mxu0 0.0
    %379 = vmatpush1.msra.mxu0 0.0
    %380 = vmatprep.subr.mxu0 0.0
    %381 = vmatpush1.msra.mxu0 0.0
    %382 = vmatprep.subr.mxu0 0.0
    %383 = vmatpush1.msra.mxu0 0.0
    %384 = vmatprep.subr.mxu0 0.0
    %385 = vmatpush1.msra.mxu0 0.0
    %386 = vmatprep.subr.mxu0 0.0
    %387 = vmatpush1.msra.mxu0 0.0
    %388 = vmatprep.subr.mxu0 0.0
    %389 = vmatpush1.msra.mxu0 0.0
    %390 = vmatprep.subr.mxu0 0.0
    %391 = vmatpush1.msra.mxu0 0.0
    %392 = vmatprep.subr.mxu0 0.0
    %393 = vmatpush1.msra.mxu0 0.0
    %394 = vmatprep.subr.mxu0 0.0
    %395 = vmatpush1.msra.mxu0 0.0
    %396 = vmatprep.subr.mxu0 0.0
    %397 = vmatpush1.msra.mxu0 0.0
    %398 = vmatprep.subr.mxu0 0.0
    %399 = vmatpush1.msra.mxu0 0.0
    %400 = vmatprep.subr.mxu0 0.0
    %401 = vmatpush1.msra.mxu0 0.0
    %402 = vmatprep.subr.mxu0 0.0
    %403 = vmatpush1.msra.mxu0 0.0
    %404 = vmatprep.subr.mxu0 0.0
    %405 = vmatpush1.msra.mxu0 0.0
    %406 = vmatprep.subr.mxu0 0.0
    %407 = vmatpush1.msra.mxu0 0.0
    %408 = vmatprep.subr.mxu0 0.0
    %409 = vmatpush1.msra.mxu0 0.0
    %410 = vmatprep.subr.mxu0 0.0
    %411 = vmatpush1.msra.mxu0 0.0
    %412 = vmatprep.subr.mxu0 0.0
    %413 = vmatpush1.msra.mxu0 0.0
    %414 = vmatprep.subr.mxu0 0.0
    %415 = vmatpush1.msra.mxu0 0.0
    %416 = vmatprep.subr.mxu0 0.0
    %417 = vmatpush1.msra.mxu0 0.0
    %418 = vmatprep.subr.mxu0 0.0
    %419 = vmatpush1.msra.mxu0 0.0
    %420 = vmatprep.subr.mxu0 0.0
    %421 = vmatpush1.msra.mxu0 0.0
    %422 = vmatprep.subr.mxu0 0.0
    %423 = vmatpush1.msra.mxu0 0.0
    %424 = vmatprep.mubr.f32.mxu0 0.0
    %425 = vmatmul.mubr.f32.gmra.mrb[0].mxu0 %v358
    %v426 = vpop.f32.mrb[0].mxu0
    %v427 = vadd.f32 0.0, %v426
    %v428 = vpop.f32.mrb[0].mxu0
    %429 = vdwg.mxu0
    %v431 = vsel %vm356, %v355, 0
    %433 = vmatprep.subr.mxu0 0.0
    %434 = vmatpush1.msra.mxu0 %v74
    %435 = vmatprep.subr.mxu0 0.0
    %436 = vmatpush1.msra.mxu0 0.0
    %437 = vmatprep.subr.mxu0 0.0
    %438 = vmatpush1.msra.mxu0 0.0
    %439 = vmatprep.subr.mxu0 0.0
    %440 = vmatpush1.msra.mxu0 0.0
    %441 = vmatprep.subr.mxu0 0.0
    %442 = vmatpush1.msra.mxu0 0.0
    %443 = vmatprep.subr.mxu0 0.0
    %444 = vmatpush1.msra.mxu0 0.0
    %445 = vmatprep.subr.mxu0 0.0
    %446 = vmatpush1.msra.mxu0 0.0
    %447 = vmatprep.subr.mxu0 0.0
    %448 = vmatpush1.msra.mxu0 0.0
    %449 = vmatprep.subr.mxu0 0.0
    %450 = vmatpush1.msra.mxu0 0.0
    %451 = vmatprep.subr.mxu0 0.0
    %452 = vmatpush1.msra.mxu0 0.0
    %453 = vmatprep.subr.mxu0 0.0
    %454 = vmatpush1.msra.mxu0 0.0
    %455 = vmatprep.subr.mxu0 0.0
    %456 = vmatpush1.msra.mxu0 0.0
    %457 = vmatprep.subr.mxu0 0.0
    %458 = vmatpush1.msra.mxu0 0.0
    %459 = vmatprep.subr.mxu0 0.0
    %460 = vmatpush1.msra.mxu0 0.0
    %461 = vmatprep.subr.mxu0 0.0
    %462 = vmatpush1.msra.mxu0 0.0
    %463 = vmatprep.subr.mxu0 0.0
    %464 = vmatpush1.msra.mxu0 0.0
    %465 = vmatprep.subr.mxu0 0.0
    %466 = vmatpush1.msra.mxu0 0.0
    %467 = vmatprep.subr.mxu0 0.0
    %468 = vmatpush1.msra.mxu0 0.0
    %469 = vmatprep.subr.mxu0 0.0
    %470 = vmatpush1.msra.mxu0 0.0
    %471 = vmatprep.subr.mxu0 0.0
    %472 = vmatpush1.msra.mxu0 0.0
    %473 = vmatprep.subr.mxu0 0.0
    %474 = vmatpush1.msra.mxu0 0.0
    %475 = vmatprep.subr.mxu0 0.0
    %476 = vmatpush1.msra.mxu0 0.0
    %477 = vmatprep.subr.mxu0 0.0
    %478 = vmatpush1.msra.mxu0 0.0
    %479 = vmatprep.subr.mxu0 0.0
    %480 = vmatpush1.msra.mxu0 0.0
    %481 = vmatprep.subr.mxu0 0.0
    %482 = vmatpush1.msra.mxu0 0.0
    %483 = vmatprep.subr.mxu0 0.0
    %484 = vmatpush1.msra.mxu0 0.0
    %485 = vmatprep.subr.mxu0 0.0
    %486 = vmatpush1.msra.mxu0 0.0
    %487 = vmatprep.subr.mxu0 0.0
    %488 = vmatpush1.msra.mxu0 0.0
    %489 = vmatprep.subr.mxu0 0.0
    %490 = vmatpush1.msra.mxu0 0.0
    %491 = vmatprep.subr.mxu0 0.0
    %492 = vmatpush1.msra.mxu0 0.0
    %493 = vmatprep.subr.mxu0 0.0
    %494 = vmatpush1.msra.mxu0 0.0
    %495 = vmatprep.subr.mxu0 0.0
    %496 = vmatpush1.msra.mxu0 0.0
    %497 = vmatprep.mubr.f32.mxu0 0.0
    %498 = vmatmul.mubr.f32.gmra.mrb[0].mxu0 %v431
    %v499 = vpop.f32.mrb[0].mxu0
    %v500 = vadd.f32 0.0, %v499
    %v501 = vpop.f32.mrb[0].mxu0
    %502 = vdwg.mxu0
    %v505 = vrot.slane %v500, 7
    %vm506 = vcmask 1041409
    %v507 = vsel %vm506, %v505, %v427
    %vm509 = vcmask 254976
    %510 = vst.msk [vmem:[#allocation10] sm:$0x3] %vm509, %v507
    %v511 = vrot.slane %v355, 7
    %v512 = vsel %vm506, %v511, %v353
    %vm514 = vcmask 58368
    %515 = vst.msk [vmem:[#allocation11] sm:$0x3] %vm514, %v512
    // Predicated region
    $region34: #{tpu_custom_call.1} parent=1 // pred_check
      _
    $region35: #{tpu_custom_call.1} parent=1 // pred_check_branch
      %517 = sbr.rel (0) target = $region37
    $region36: #{tpu_custom_call.1} parent=1 // pred_region
      %s519 = ssub.s32 32, 32
      %520 = vsyncadd [#allocation4], %s519
      %s522 = sshll.u32 [#allocation10], 4
      %s523 = int_to_ptr.vmem [resolvable:$true] %s522
      %525 = dma.vmem_to_hbm [thread:$0]  %s523, 32, %s4, [#allocation4]
    $region37: #{tpu_custom_call.1} parent=1 // pred_fallthru
      _
    // Predicated region
    $region38: #{tpu_custom_call.1} parent=1 // pred_check
      _
    $region39: #{tpu_custom_call.1} parent=1 // pred_check_branch
      %527 = sbr.rel (0) target = $region41
    $region40: #{tpu_custom_call.1} parent=1 // pred_region
      %s529 = ssub.s32 32, 32
      %530 = vsyncadd [#allocation12], %s529
      %s532 = sshll.u32 [#allocation11], 4
      %s533 = int_to_ptr.vmem [resolvable:$true] %s532
      %535 = dma.vmem_to_hbm [thread:$0]  %s533, 32, %s5, [#allocation12]
    $region41: #{tpu_custom_call.1} parent=1 // pred_fallthru
      _
    // Predicated region
    $region42: #{tpu_custom_call.1} parent=1 // pred_check
      _
    $region43: #{tpu_custom_call.1} parent=1 // pred_check_branch
      %537 = sbr.rel (0) target = $region45
    $region44: #{tpu_custom_call.1} parent=1 // pred_region
      %538 = dma.done [#allocation4], 32
    $region45: #{tpu_custom_call.1} parent=1 // pred_fallthru
      _
    // Predicated region
    $region46: #{tpu_custom_call.1} parent=1 // pred_check
      _
    $region47: #{tpu_custom_call.1} parent=1 // pred_check_branch
      %540 = sbr.rel (0) target = $region49
    $region48: #{tpu_custom_call.1} parent=1 // pred_region
      %541 = dma.done [#allocation12], 32
    $region49: #{tpu_custom_call.1} parent=1 // pred_fallthru
      _
    %542 = vsyncpa [#allocation3], 1
    %543 = vsyncpa [#allocation6], 1
    %544 = vsyncpa [#allocation9], 1
    %545 = vsyncpa [#allocation4], 1
    %546 = vsyncpa [#allocation12], 1

</llo_original>
